<compile_context>
chip_gen: v7x
topology: tpu7x:2x2x1
jax: 0.10.0
libtpu: 0.0.40
codegen_flags: <defaults>
</compile_context>

<pallas_src>
import functools

import jax
import jax.numpy as jnp
from jax.experimental import pallas as pl
from jax.experimental.pallas import tpu as pltpu


def _cnn_generator_kernel(C, K, Wp, L, B,
                          rand_ref,              # SMEM (N_pad,)      scalar prefetch
                          x_ref,                 # VMEM (1, C, B*L)   padded+flat x
                          w1_ref, b1_ref,        # VMEM (8, K*K*8), (8, 1)
                          w2_ref, b2_ref,        # VMEM (C, K*K*8), (C, 1)
                          mask_ref,              # VMEM (1, B*L)      interior mask
                          mixed_ref,             # VMEM out (1, C, B*L)
                          ssm_ref,               # VMEM out (B, 1, 1) sum(mixed^2)
                          ssx_ref,               # VMEM out (B, 1, 1) sum(x^2)
                          x8_ref):               # VMEM scratch (8, B*L)
    i = pl.program_id(0)
    KK = K * K
    BL = B * L

    x = x_ref[0]                                 # (C, BL) zero-padded per image
    mask = mask_ref[...]                         # (1, BL)

    # 8-row copy of x so every sublane-concat piece below is tile-aligned.
    # Rows C..7 carry zero weight columns; we still clear them every step so
    # uninitialized VMEM can never inject NaN/Inf (safe under "parallel" grid).
    x8_ref[...] = jnp.zeros_like(x8_ref)
    x8_ref[0:C, :] = x
    x8 = x8_ref[...]                             # (8, BL)

    def conv(inp8, w_ref, b_ref):
        # inp8: (8, BL), zero on every image border / lane tail / rows >= C.
        parts = []
        for t in range(KK):
            dy, dx = t // K, t % K
            off = (dy - 1) * Wp + (dx - 1)       # flat tap offset
            if off == 0:
                parts.append(inp8)
            else:
                # shifted[:, p] = inp8[:, p + off]; exact at interior pixels,
                # border/tail garbage is killed by the interior mask.
                parts.append(pltpu.roll(inp8, shift=(-off) % BL, axis=1))
        stacked = jnp.concatenate(parts, axis=0)          # (KK*8, BL), aligned pieces
        return jnp.dot(w_ref[...], stacked,
                       preferred_element_type=jnp.float32) + b_ref[...]

    # conv1 + ReLU; masking restores the zero-padded form conv2 relies on.
    # (rows C..7 of h8 stay zero because their weight rows / bias are zero.)
    h8 = jnp.maximum(conv(x8, w1_ref, b1_ref), 0.0) * mask        # (8, BL)
    y = conv(h8, w2_ref, b2_ref)                                  # (C, BL)

    # Per-batch random mix r*y + (1-r)*x; r is built as a lane vector from SMEM.
    r_parts = [jnp.full((1, L), rand_ref[i * B + j], jnp.float32)
               for j in range(B)]
    r_vec = r_parts[0] if B == 1 else jnp.concatenate(r_parts, axis=1)   # (1, BL)
    mixed = (r_vec * y + (1.0 - r_vec) * x) * mask                # garbage lanes -> 0
    mixed_ref[0] = mixed

    # Per-image Frobenius^2 partials (mixed and original x) for the global norm.
    for j in range(B):
        sl = slice(j * L, (j + 1) * L)
        mj = mixed[:, sl]
        xj = x[:, sl]
        ssm_ref[j] = jnp.sum(mj * mj).reshape(1, 1)
        ssx_ref[j] = jnp.sum(xj * xj).reshape(1, 1)


def cnn_generator(x, w1, b1, w2, b2, rand):
    """x: (N, C, H, W) f32; w1/w2: (C, C, K, K); b1/b2: (C,); rand: (N,)."""
    N, C, H, W = x.shape
    K = w1.shape[-1]
    # The flat-roll tap addressing + interior mask is exact only for the
    # module's config (3x3 kernel, stride 1, padding 1) and C <= 8 rows.
    assert K == 3 and C <= 8, "kernel assumes 3x3 conv, stride=1, pad=1, C<=8"
    KK = K * K
    Hp, Wp = H + 2, W + 2
    L_img = Hp * Wp
    L = pl.cdiv(L_img, 128) * 128                # lane-aligned per-image length
    # Static invariant of the roll trick: interior index + any tap offset
    # never leaves the image's own [0, L_img) segment.
    assert (L_img - Wp - 2) + (Wp + 1) < L_img and (Wp + 1) - (Wp + 1) >= 0

    # --- choose images-per-step B and number of chunks -----------------------
    per_img_vmem = (KK * 8 + 8 + 6 * C) * L * 4  # stacked + x8 + in/out/temps (f32)
    B = min(16, max(1, (8 << 20) // per_img_vmem))
    if N > 1:
        B = min(B, -(-N // 2))                   # keep >= 2 grid steps
    B = max(1, min(B, N))
    nc = -(-N // B)                              # grid steps (chunks)
    N_pad = nc * B
    BL = B * L

    x = x.astype(jnp.float32)

    # --- layout plumbing (one fused XLA pass): batch-pad, spatial-pad, -------
    # --- flatten to lanes, pack B images per chunk on the lane axis ----------
    # TODO(synk): the padded slab could be assembled in-kernel from raw
    # (C, H*W) blocks with strided row copies to remove this extra HBM pass.
    xb = jnp.pad(x, ((0, N_pad - N), (0, 0), (1, 1), (1, 1)))        # (N_pad,C,Hp,Wp)
    xf = jnp.pad(xb.reshape(N_pad, C, L_img),
                 ((0, 0), (0, 0), (0, L - L_img)))                   # (N_pad,C,L)
    xc = jnp.transpose(xf.reshape(nc, B, C, L),
                       (0, 2, 1, 3)).reshape(nc, C, BL)              # (nc,C,B*L)

    # Fused conv weights: column t*8 + ci = w[c_out, ci, dy, dx]; rows/columns
    # beyond C are zero.  conv1 keeps 8 output rows so its result feeds conv2's
    # 8-row operand directly (no in-kernel re-padding).
    def prep_w(w, out_rows):
        wt = jnp.transpose(w.astype(jnp.float32), (0, 2, 3, 1))      # (co,dy,dx,ci)
        wt = wt.reshape(C, KK, C)
        wt = jnp.pad(wt, ((0, out_rows - C), (0, 0), (0, 8 - C)))
        return wt.reshape(out_rows, KK * 8)

    w1c = prep_w(w1, 8)
    w2c = prep_w(w2, C)
    b1c = jnp.pad(b1.astype(jnp.float32), (0, 8 - C)).reshape(8, 1)
    b2c = b2.astype(jnp.float32).reshape(C, 1)

    # Interior mask: 1 at real pixels of each packed image, 0 at border/tail.
    mask_img = jnp.pad(jnp.ones((H, W), jnp.float32), ((1, 1), (1, 1)))
    mask_img = jnp.pad(mask_img.reshape(1, L_img), ((0, 0), (0, L - L_img)))
    mask = jnp.tile(mask_img, (1, B))                                 # (1, BL)

    rand_p = jnp.pad(rand.astype(jnp.float32), (0, N_pad - N))

    kernel = functools.partial(_cnn_generator_kernel, C, K, Wp, L, B)

    mixed, ssm, ssx = pl.pallas_call(
        kernel,
        out_shape=(jax.ShapeDtypeStruct((nc, C, BL), jnp.float32),
                   jax.ShapeDtypeStruct((N_pad, 1, 1), jnp.float32),
                   jax.ShapeDtypeStruct((N_pad, 1, 1), jnp.float32)),
        grid_spec=pltpu.PrefetchScalarGridSpec(
            num_scalar_prefetch=1,                      # rand -> SMEM
            grid=(nc,),
            in_specs=[
                pl.BlockSpec((1, C, BL), lambda i, s: (i, 0, 0)),     # x chunk
                pl.BlockSpec((8, KK * 8), lambda i, s: (0, 0)),       # w1 (resident)
                pl.BlockSpec((8, 1), lambda i, s: (0, 0)),            # b1
                pl.BlockSpec((C, KK * 8), lambda i, s: (0, 0)),       # w2
                pl.BlockSpec((C, 1), lambda i, s: (0, 0)),            # b2
                pl.BlockSpec((1, BL), lambda i, s: (0, 0)),           # mask
            ],
            out_specs=[
                pl.BlockSpec((1, C, BL), lambda i, s: (i, 0, 0)),     # mixed
                pl.BlockSpec((B, 1, 1), lambda i, s: (i, 0, 0)),      # sum(mixed^2)
                pl.BlockSpec((B, 1, 1), lambda i, s: (i, 0, 0)),      # sum(x^2)
            ],
            scratch_shapes=[pltpu.VMEM((8, BL), jnp.float32)],
        ),
        compiler_params=pltpu.CompilerParams(
            dimension_semantics=("parallel",),          # megacore on v7x
            vmem_limit_bytes=64 * 1024 * 1024),
    )(rand_p, xc, w1c, b1c, w2c, b2c, mask)

    # --- global Frobenius rescale (both norms were reduced in-kernel) --------
    ss_m = ssm.reshape(N_pad)[:N]
    ss_x = ssx.reshape(N_pad)[:N]
    scale = jnp.sqrt(jnp.sum(ss_x)) / jnp.sqrt(jnp.sum(ss_m))

    # Unpack lanes, crop to the valid HxW window, THEN rescale (one XLA pass
    # over only the valid bytes).
    m = mixed.reshape(nc, C, B, L)[:, :, :, :L_img]
    m = m.reshape(nc, C, B, Hp, Wp)[:, :, :, 1:1 + H, 1:1 + W]
    m = jnp.transpose(m, (0, 2, 1, 3, 4)).reshape(N_pad, C, H, W)[:N]
    return m * scale


def _reference(x, w1, b1, w2, b2, rand):
    """Pure-JAX reference of the PyTorch forward."""
    dn = ("NCHW", "OIHW", "NCHW")
    c1 = jax.lax.conv_general_dilated(x, w1, (1, 1), ((1, 1), (1, 1)),
                                      dimension_numbers=dn)
    c1 = jnp.maximum(c1 + b1[None, :, None, None], 0.0)
    c2 = jax.lax.conv_general_dilated(c1, w2, (1, 1), ((1, 1), (1, 1)),
                                      dimension_numbers=dn)
    c2 = c2 + b2[None, :, None, None]
    r = rand[:, None, None, None]
    mixed = r * c2 + (1.0 - r) * x
    x_c = jnp.sqrt(jnp.sum(mixed * mixed))
    x_cf = jnp.sqrt(jnp.sum(x * x))
    return mixed / x_c * x_cf


if __name__ == "__main__":
    key = jax.random.PRNGKey(0)
    k_x, k_w1, k_w2, k_r = jax.random.split(key, 4)

    # Small shapes consistent with the module (imdim=3 channels, 3x3 kernels).
    N, C, H, W, K = 2, 3, 16, 16, 3

    x = jax.random.normal(k_x, (N, C, H, W), jnp.float32)
    w1 = jax.random.normal(k_w1, (C, C, K, K), jnp.float32)   # torch.randn init
    b1 = jnp.zeros((C,), jnp.float32)                         # torch.zeros init
    w2 = jax.random.normal(k_w2, (C, C, K, K), jnp.float32)
    b2 = jnp.zeros((C,), jnp.float32)
    # TODO(synk): torch.rand(len(x),1,1,1).cuda() uses torch's CUDA RNG; here the
    # per-batch mixing scalars are drawn deterministically from a JAX key.
    rand = jax.random.uniform(k_r, (N,), jnp.float32)

    out = cnn_generator(x, w1, b1, w2, b2, rand)
    jax.block_until_ready(out)

    ref = _reference(x, w1, b1, w2, b2, rand)
    assert out.shape == (N, C, H, W)
    assert jnp.allclose(out, ref, rtol=1e-3, atol=1e-3), "mismatch vs reference"

    print("KERNEL_OK")
</pallas_src>

<mosaic_0001>
module attributes {stable_mosaic.version = 11 : i64} {
  func.func @_cnn_generator_kernel(%arg0: i32, %arg1: memref<2xf32, #tpu.memory_space<smem>>, %arg2: memref<1x3x384xf32, #tpu.memory_space<vmem>>, %arg3: memref<8x72xf32, #tpu.memory_space<vmem>>, %arg4: memref<8x1xf32, #tpu.memory_space<vmem>>, %arg5: memref<3x72xf32, #tpu.memory_space<vmem>>, %arg6: memref<3x1xf32, #tpu.memory_space<vmem>>, %arg7: memref<1x384xf32, #tpu.memory_space<vmem>>, %arg8: memref<1x3x384xf32, #tpu.memory_space<vmem>>, %arg9: memref<1x1x1xf32, #tpu.memory_space<vmem>>, %arg10: memref<1x1x1xf32, #tpu.memory_space<vmem>>, %arg11: memref<8x384xf32, #tpu.memory_space<vmem>>) attributes {dimension_semantics = [#tpu.dimension_semantics<parallel>], iteration_bounds = array<i64: 2>, scalar_prefetch = 1 : i64, scratch_operands = 1 : i64, tpu.core_type = #tpu.core_type<tc>, window_params = [{transform_indices = @transform_0, window_bounds = array<i64: 1, 3, 384>}, {pipeline_mode = #tpu.pipeline_mode<synchronous>, transform_indices = @transform_1, window_bounds = array<i64: 8, 72>}, {pipeline_mode = #tpu.pipeline_mode<synchronous>, transform_indices = @transform_2, window_bounds = array<i64: 8, 1>}, {pipeline_mode = #tpu.pipeline_mode<synchronous>, transform_indices = @transform_3, window_bounds = array<i64: 3, 72>}, {pipeline_mode = #tpu.pipeline_mode<synchronous>, transform_indices = @transform_4, window_bounds = array<i64: 3, 1>}, {pipeline_mode = #tpu.pipeline_mode<synchronous>, transform_indices = @transform_5, window_bounds = array<i64: 1, 384>}, {transform_indices = @transform_6, window_bounds = array<i64: 1, 3, 384>}, {transform_indices = @transform_7, window_bounds = array<i64: 1, 1, 1>}, {transform_indices = @transform_8, window_bounds = array<i64: 1, 1, 1>}]} {
    %c0 = arith.constant 0 : index
    %c0_0 = arith.constant 0 : index
    %c0_1 = arith.constant 0 : index
    %0 = vector.load %arg2[%c0, %c0_0, %c0_1] : memref<1x3x384xf32, #tpu.memory_space<vmem>>, vector<1x3x384xf32>
    %1 = vector.shape_cast %0 : vector<1x3x384xf32> to vector<3x384xf32>
    %c0_2 = arith.constant 0 : index
    %c0_3 = arith.constant 0 : index
    %2 = vector.load %arg7[%c0_2, %c0_3] : memref<1x384xf32, #tpu.memory_space<vmem>>, vector<1x384xf32>
    %cst = arith.constant 0.000000e+00 : f32
    %3 = vector.broadcast %cst : f32 to vector<8x384xf32>
    %c0_4 = arith.constant 0 : index
    %c0_5 = arith.constant 0 : index
    %4 = vector.load %arg11[%c0_4, %c0_5] : memref<8x384xf32, #tpu.memory_space<vmem>>, vector<8x384xf32>
    tpu.vector_store %arg11[%c0_4, %c0_5], %3 {strides = array<i32>} : memref<8x384xf32, #tpu.memory_space<vmem>>, vector<8x384xf32>,
    %c0_6 = arith.constant 0 : index
    %c0_7 = arith.constant 0 : index
    %5 = vector.load %arg11[%c0_6, %c0_7] : memref<8x384xf32, #tpu.memory_space<vmem>>, vector<3x384xf32>
    tpu.vector_store %arg11[%c0_6, %c0_7], %1 {strides = array<i32>} : memref<8x384xf32, #tpu.memory_space<vmem>>, vector<3x384xf32>,
    %c0_8 = arith.constant 0 : index
    %c0_9 = arith.constant 0 : index
    %6 = vector.load %arg11[%c0_8, %c0_9] : memref<8x384xf32, #tpu.memory_space<vmem>>, vector<8x384xf32>
    %c19_i32 = arith.constant 19 : i32
    %7 = tpu.dynamic_rotate %6 by %c19_i32 dim 1 : vector<8x384xf32>, i32 -> vector<8x384xf32>
    %c18_i32 = arith.constant 18 : i32
    %8 = tpu.dynamic_rotate %6 by %c18_i32 dim 1 : vector<8x384xf32>, i32 -> vector<8x384xf32>
    %c17_i32 = arith.constant 17 : i32
    %9 = tpu.dynamic_rotate %6 by %c17_i32 dim 1 : vector<8x384xf32>, i32 -> vector<8x384xf32>
    %c1_i32 = arith.constant 1 : i32
    %10 = tpu.dynamic_rotate %6 by %c1_i32 dim 1 : vector<8x384xf32>, i32 -> vector<8x384xf32>
    %c383_i32 = arith.constant 383 : i32
    %11 = tpu.dynamic_rotate %6 by %c383_i32 dim 1 : vector<8x384xf32>, i32 -> vector<8x384xf32>
    %c367_i32 = arith.constant 367 : i32
    %12 = tpu.dynamic_rotate %6 by %c367_i32 dim 1 : vector<8x384xf32>, i32 -> vector<8x384xf32>
    %c366_i32 = arith.constant 366 : i32
    %13 = tpu.dynamic_rotate %6 by %c366_i32 dim 1 : vector<8x384xf32>, i32 -> vector<8x384xf32>
    %c365_i32 = arith.constant 365 : i32
    %14 = tpu.dynamic_rotate %6 by %c365_i32 dim 1 : vector<8x384xf32>, i32 -> vector<8x384xf32>
    %15 = tpu.concatenate %7, %8, %9, %10, %6, %11, %12, %13, %14 in 0 : vector<8x384xf32>, vector<8x384xf32>, vector<8x384xf32>, vector<8x384xf32>, vector<8x384xf32>, vector<8x384xf32>, vector<8x384xf32>, vector<8x384xf32>, vector<8x384xf32> -> vector<72x384xf32>
    %c0_10 = arith.constant 0 : index
    %c0_11 = arith.constant 0 : index
    %16 = vector.load %arg3[%c0_10, %c0_11] : memref<8x72xf32, #tpu.memory_space<vmem>>, vector<8x72xf32>
    %cst_12 = arith.constant dense<0.000000e+00> : vector<8x384xf32>
    %17 = tpu.matmul %16, %15, %cst_12 {dimension_numbers = #tpu.dot_dimension_numbers<[1], [0], [0], [1], [0, 0, 1, 1], [], []>} : vector<8x72xf32>, vector<72x384xf32>, vector<8x384xf32> -> vector<8x384xf32>
    %c0_13 = arith.constant 0 : index
    %c0_14 = arith.constant 0 : index
    %18 = vector.load %arg4[%c0_13, %c0_14] : memref<8x1xf32, #tpu.memory_space<vmem>>, vector<8x1xf32>
    %19 = vector.broadcast %18 : vector<8x1xf32> to vector<8x384xf32>
    %20 = arith.addf %17, %19 : vector<8x384xf32>
    %cst_15 = arith.constant 0.000000e+00 : f32
    %21 = vector.broadcast %cst_15 : f32 to vector<8x384xf32>
    %22 = arith.maximumf %20, %21 : vector<8x384xf32>
    %23 = vector.broadcast %2 : vector<1x384xf32> to vector<8x384xf32>
    %24 = arith.mulf %22, %23 : vector<8x384xf32>
    %c19_i32_16 = arith.constant 19 : i32
    %25 = tpu.dynamic_rotate %24 by %c19_i32_16 dim 1 : vector<8x384xf32>, i32 -> vector<8x384xf32>
    %c18_i32_17 = arith.constant 18 : i32
    %26 = tpu.dynamic_rotate %24 by %c18_i32_17 dim 1 : vector<8x384xf32>, i32 -> vector<8x384xf32>
    %c17_i32_18 = arith.constant 17 : i32
    %27 = tpu.dynamic_rotate %24 by %c17_i32_18 dim 1 : vector<8x384xf32>, i32 -> vector<8x384xf32>
    %c1_i32_19 = arith.constant 1 : i32
    %28 = tpu.dynamic_rotate %24 by %c1_i32_19 dim 1 : vector<8x384xf32>, i32 -> vector<8x384xf32>
    %c383_i32_20 = arith.constant 383 : i32
    %29 = tpu.dynamic_rotate %24 by %c383_i32_20 dim 1 : vector<8x384xf32>, i32 -> vector<8x384xf32>
    %c367_i32_21 = arith.constant 367 : i32
    %30 = tpu.dynamic_rotate %24 by %c367_i32_21 dim 1 : vector<8x384xf32>, i32 -> vector<8x384xf32>
    %c366_i32_22 = arith.constant 366 : i32
    %31 = tpu.dynamic_rotate %24 by %c366_i32_22 dim 1 : vector<8x384xf32>, i32 -> vector<8x384xf32>
    %c365_i32_23 = arith.constant 365 : i32
    %32 = tpu.dynamic_rotate %24 by %c365_i32_23 dim 1 : vector<8x384xf32>, i32 -> vector<8x384xf32>
    %33 = tpu.concatenate %25, %26, %27, %28, %24, %29, %30, %31, %32 in 0 : vector<8x384xf32>, vector<8x384xf32>, vector<8x384xf32>, vector<8x384xf32>, vector<8x384xf32>, vector<8x384xf32>, vector<8x384xf32>, vector<8x384xf32>, vector<8x384xf32> -> vector<72x384xf32>
    %c0_24 = arith.constant 0 : index
    %c0_25 = arith.constant 0 : index
    %34 = vector.load %arg5[%c0_24, %c0_25] : memref<3x72xf32, #tpu.memory_space<vmem>>, vector<3x72xf32>
    %cst_26 = arith.constant dense<0.000000e+00> : vector<3x384xf32>
    %35 = tpu.matmul %34, %33, %cst_26 {dimension_numbers = #tpu.dot_dimension_numbers<[1], [0], [0], [1], [0, 0, 1, 1], [], []>} : vector<3x72xf32>, vector<72x384xf32>, vector<3x384xf32> -> vector<3x384xf32>
    %c0_27 = arith.constant 0 : index
    %c0_28 = arith.constant 0 : index
    %36 = vector.load %arg6[%c0_27, %c0_28] : memref<3x1xf32, #tpu.memory_space<vmem>>, vector<3x1xf32>
    %37 = vector.broadcast %36 : vector<3x1xf32> to vector<3x384xf32>
    %38 = arith.addf %35, %37 : vector<3x384xf32>
    %c1_i32_29 = arith.constant 1 : i32
    %39 = arith.muli %arg0, %c1_i32_29 : i32
    %c0_i32 = arith.constant 0 : i32
    %40 = arith.addi %39, %c0_i32 : i32
    %41 = arith.index_cast %40 : i32 to index
    %42 = memref.load %arg1[%41] : memref<2xf32, #tpu.memory_space<smem>>
    %43 = vector.broadcast %42 : f32 to vector<1x384xf32>
    %44 = vector.broadcast %43 : vector<1x384xf32> to vector<3x384xf32>
    %45 = arith.mulf %44, %38 : vector<3x384xf32>
    %cst_30 = arith.constant 1.000000e+00 : f32
    %46 = vector.broadcast %cst_30 : f32 to vector<1x384xf32>
    %47 = arith.subf %46, %43 : vector<1x384xf32>
    %48 = vector.broadcast %47 : vector<1x384xf32> to vector<3x384xf32>
    %49 = arith.mulf %48, %1 : vector<3x384xf32>
    %50 = arith.addf %45, %49 : vector<3x384xf32>
    %51 = vector.broadcast %2 : vector<1x384xf32> to vector<3x384xf32>
    %52 = arith.mulf %50, %51 : vector<3x384xf32>
    %c0_31 = arith.constant 0 : index
    %c0_32 = arith.constant 0 : index
    %c0_33 = arith.constant 0 : index
    %53 = vector.load %arg8[%c0_31, %c0_32, %c0_33] : memref<1x3x384xf32, #tpu.memory_space<vmem>>, vector<1x3x384xf32>
    %54 = vector.shape_cast %53 : vector<1x3x384xf32> to vector<3x384xf32>
    %55 = vector.shape_cast %52 : vector<3x384xf32> to vector<1x3x384xf32>
    tpu.vector_store %arg8[%c0_31, %c0_32, %c0_33], %55 {strides = array<i32>} : memref<1x3x384xf32, #tpu.memory_space<vmem>>, vector<1x3x384xf32>,
    %56 = arith.mulf %52, %52 : vector<3x384xf32>
    %57 = vector.shape_cast %56 : vector<3x384xf32> to vector<1x3x384xf32>
    %cst_34 = arith.constant dense<0.000000e+00> : vector<1xf32>
    %58 = vector.multi_reduction <add>, %57, %cst_34 [1, 2] : vector<1x3x384xf32> to vector<1xf32>
    %59 = vector.shape_cast %58 : vector<1xf32> to vector<1x1x1xf32>
    %60 = vector.extract %59[0, 0, 0] : f32 from vector<1x1x1xf32>
    %61 = vector.broadcast %60 : f32 to vector<1x1xf32>
    %c0_35 = arith.constant 0 : index
    %c0_36 = arith.constant 0 : index
    %c0_37 = arith.constant 0 : index
    %62 = vector.load %arg9[%c0_35, %c0_36, %c0_37] : memref<1x1x1xf32, #tpu.memory_space<vmem>>, vector<1x1x1xf32>
    %63 = vector.shape_cast %62 : vector<1x1x1xf32> to vector<1x1xf32>
    %64 = vector.shape_cast %61 : vector<1x1xf32> to vector<1x1x1xf32>
    tpu.vector_store %arg9[%c0_35, %c0_36, %c0_37], %64 {strides = array<i32>} : memref<1x1x1xf32, #tpu.memory_space<vmem>>, vector<1x1x1xf32>,
    %65 = arith.mulf %1, %1 : vector<3x384xf32>
    %66 = vector.shape_cast %65 : vector<3x384xf32> to vector<1x3x384xf32>
    %cst_38 = arith.constant dense<0.000000e+00> : vector<1xf32>
    %67 = vector.multi_reduction <add>, %66, %cst_38 [1, 2] : vector<1x3x384xf32> to vector<1xf32>
    %68 = vector.shape_cast %67 : vector<1xf32> to vector<1x1x1xf32>
    %69 = vector.extract %68[0, 0, 0] : f32 from vector<1x1x1xf32>
    %70 = vector.broadcast %69 : f32 to vector<1x1xf32>
    %c0_39 = arith.constant 0 : index
    %c0_40 = arith.constant 0 : index
    %c0_41 = arith.constant 0 : index
    %71 = vector.load %arg10[%c0_39, %c0_40, %c0_41] : memref<1x1x1xf32, #tpu.memory_space<vmem>>, vector<1x1x1xf32>
    %72 = vector.shape_cast %71 : vector<1x1x1xf32> to vector<1x1xf32>
    %73 = vector.shape_cast %70 : vector<1x1xf32> to vector<1x1x1xf32>
    tpu.vector_store %arg10[%c0_39, %c0_40, %c0_41], %73 {strides = array<i32>} : memref<1x1x1xf32, #tpu.memory_space<vmem>>, vector<1x1x1xf32>,
    return
  }
  func.func @transform_0(%arg0: i32, %arg1: memref<2xf32, #tpu.memory_space<smem>>) -> (i32, i32, i32) {
    %c0_i32 = arith.constant 0 : i32
    %c0_i32_0 = arith.constant 0 : i32
    %c0_i32_1 = arith.constant 0 : i32
    return %arg0, %c0_i32, %c0_i32_0 : i32, i32, i32
  }
  func.func @transform_1(%arg0: i32, %arg1: memref<2xf32, #tpu.memory_space<smem>>) -> (i32, i32) {
    %c0_i32 = arith.constant 0 : i32
    %c0_i32_0 = arith.constant 0 : i32
    %c0_i32_1 = arith.constant 0 : i32
    return %c0_i32, %c0_i32_0 : i32, i32
  }
  func.func @transform_2(%arg0: i32, %arg1: memref<2xf32, #tpu.memory_space<smem>>) -> (i32, i32) {
    %c0_i32 = arith.constant 0 : i32
    %c0_i32_0 = arith.constant 0 : i32
    %c0_i32_1 = arith.constant 0 : i32
    return %c0_i32, %c0_i32_0 : i32, i32
  }
  func.func @transform_3(%arg0: i32, %arg1: memref<2xf32, #tpu.memory_space<smem>>) -> (i32, i32) {
    %c0_i32 = arith.constant 0 : i32
    %c0_i32_0 = arith.constant 0 : i32
    %c0_i32_1 = arith.constant 0 : i32
    return %c0_i32, %c0_i32_0 : i32, i32
  }
  func.func @transform_4(%arg0: i32, %arg1: memref<2xf32, #tpu.memory_space<smem>>) -> (i32, i32) {
    %c0_i32 = arith.constant 0 : i32
    %c0_i32_0 = arith.constant 0 : i32
    %c0_i32_1 = arith.constant 0 : i32
    return %c0_i32, %c0_i32_0 : i32, i32
  }
  func.func @transform_5(%arg0: i32, %arg1: memref<2xf32, #tpu.memory_space<smem>>) -> (i32, i32) {
    %c0_i32 = arith.constant 0 : i32
    %c0_i32_0 = arith.constant 0 : i32
    %c0_i32_1 = arith.constant 0 : i32
    return %c0_i32, %c0_i32_0 : i32, i32
  }
  func.func @transform_6(%arg0: i32, %arg1: memref<2xf32, #tpu.memory_space<smem>>) -> (i32, i32, i32) {
    %c0_i32 = arith.constant 0 : i32
    %c0_i32_0 = arith.constant 0 : i32
    %c0_i32_1 = arith.constant 0 : i32
    return %arg0, %c0_i32, %c0_i32_0 : i32, i32, i32
  }
  func.func @transform_7(%arg0: i32, %arg1: memref<2xf32, #tpu.memory_space<smem>>) -> (i32, i32, i32) {
    %c0_i32 = arith.constant 0 : i32
    %c0_i32_0 = arith.constant 0 : i32
    %c0_i32_1 = arith.constant 0 : i32
    return %arg0, %c0_i32, %c0_i32_0 : i32, i32, i32
  }
  func.func @transform_8(%arg0: i32, %arg1: memref<2xf32, #tpu.memory_space<smem>>) -> (i32, i32, i32) {
    %c0_i32 = arith.constant 0 : i32
    %c0_i32_0 = arith.constant 0 : i32
    %c0_i32_1 = arith.constant 0 : i32
    return %arg0, %c0_i32, %c0_i32_0 : i32, i32, i32
  }
}

</mosaic_0001>

<llo_original>
// kernel: tpu_custom_call.1
$region0: #{tpu_custom_call.1}
  #allocation0 [shape = 'u32[]', space=smem, size = 0x4, offset = 0x4, fixed_abs, tag = 'smem constant byte address 0x4 - core index']
  #allocation1 [shape = 'u32[144,128]{1,0:T(1,128)}', space=vmem, size = 0x12000, scoped, tag = 'internal scratch']
  #allocation2 [shape = 'f32[8,384]{1,0:T(8,128)}', space=vmem, size = 0x3000, scoped, tag = 'scratch operand']
  #allocation3 [shape = 's32[1]{0}', space=sflag, size = 0x4, scoped, tag = 'scoped memory for tpu_custom_call.1']
  #allocation4 [shape = 'u8[512]{0}', space=smem, size = 0x200, scoped, tag = 'prefetched SMEM operand 0']
  %s0 = inlined_call_operand.hbm [shape: f32[2], index: 0, kind: input, shape index: {}]
  %s1 = inlined_call_operand.hbm [shape: f32[2,3,384], index: 1, kind: input, shape index: {}]
  %s2 = inlined_call_operand.hbm [shape: f32[8,72], index: 2, kind: input, shape index: {}]
  %s3 = inlined_call_operand.hbm [shape: f32[8,1], index: 3, kind: input, shape index: {}]
  %s4 = inlined_call_operand.hbm [shape: f32[3,72], index: 4, kind: input, shape index: {}]
  %s5 = inlined_call_operand.hbm [shape: f32[3,1], index: 5, kind: input, shape index: {}]
  %s6 = inlined_call_operand.hbm [shape: f32[1,384], index: 6, kind: input, shape index: {}]
  %s7 = inlined_call_operand.hbm [shape: f32[2,3,384], index: 7, kind: output, shape index: {0}]
  %s8 = inlined_call_operand.hbm [shape: f32[2,1,1], index: 8, kind: output, shape index: {1}]
  %s9 = inlined_call_operand.hbm [shape: f32[2,1,1], index: 9, kind: output, shape index: {2}]
  %10 = xla_tuple %s7, %s8, %s9
  %s11 = sld [smem:[#allocation0]]
  $region97: #{tpu_custom_call.1} parent=0
    _
  %s13 = ssub.s32 1, %s11
  %s14 = scalar_select 0, %s13, %s11
  %16 = dma.hbm_to_smem %s0, 16, [#allocation4], [#allocation3]
  %17 = dma.done [#allocation3], 16
  %18 = sfence
  $region1: #{tpu_custom_call.1} parent=0
    #allocation5 [shape = 'u8[12288]{0}', space=vmem, size = 0x3000, scoped, tag = 'input window, operand 1']
    #allocation6 [shape = 's32[2]{0}', space=sflag, size = 0x8, scoped, tag = 'scoped memory for tpu_custom_call.1']
    #allocation7 [shape = 's32[2]{0}', space=sflag, size = 0x8, scoped, tag = 'scoped memory for tpu_custom_call.1']
    #allocation8 [shape = 'u8[4096]{0}', space=vmem, size = 0x1000, scoped, tag = 'input window, operand 2, single buffered']
    #allocation9 [shape = 's32[1]{0}', space=sflag, size = 0x4, scoped, tag = 'scoped memory for tpu_custom_call.1']
    #allocation10 [shape = 'u8[4096]{0}', space=vmem, size = 0x1000, scoped, tag = 'input window, operand 3, single buffered']
    #allocation11 [shape = 'u8[2048]{0}', space=vmem, size = 0x800, scoped, tag = 'input window, operand 4, single buffered']
    #allocation12 [shape = 's32[1]{0}', space=sflag, size = 0x4, scoped, tag = 'scoped memory for tpu_custom_call.1']
    #allocation13 [shape = 'u8[2048]{0}', space=vmem, size = 0x800, scoped, tag = 'input window, operand 5, single buffered']
    #allocation14 [shape = 'u8[1536]{0}', space=vmem, size = 0x800, scoped, tag = 'input window, operand 6, single buffered']
    #allocation15 [shape = 's32[1]{0}', space=sflag, size = 0x4, scoped, tag = 'scoped memory for tpu_custom_call.1']
    #allocation16 [shape = 'u8[12288]{0}', space=vmem, size = 0x3000, scoped, tag = 'output window, operand 0']
    #allocation17 [shape = 'u8[1024]{0}', space=vmem, size = 0x400, scoped, tag = 'output window, operand 1']
    #allocation18 [shape = 's32[2]{0}', space=sflag, size = 0x8, scoped, tag = 'scoped memory for tpu_custom_call.1']
    #allocation19 [shape = 'u8[1024]{0}', space=vmem, size = 0x400, scoped, tag = 'output window, operand 2']
    %19 = vsyncpa [#allocation6], 0
    %s20 = scalar_lea.sflag [#allocation6], 1
    %21 = vsyncpa %s20, 0
    %22 = vsyncpa [#allocation9], 0
    %23 = vsyncpa [#allocation12], 0
    %24 = vsyncpa [#allocation15], 0
    %25 = vsyncpa [#allocation7], 0
    %s26 = scalar_lea.sflag [#allocation7], 1
    %27 = vsyncpa %s26, 0
    %28 = vsyncpa [#allocation18], 0
    %s29 = scalar_lea.sflag [#allocation18], 1
    %30 = vsyncpa %s29, 0
    loop: start=0, step=1, limit=4
    $region2: #{tpu_custom_call.1} parent=1 // loop_pre_header
      _
    $region3: #{tpu_custom_call.1} parent=1 // loop_header
      %s32 = sphi 0, %s36
      %p33 = scmp.ge.s32.totalorder %s32, 4
      %s42 = sphi 0, %s44
      %s45 = sphi 0, %s42
      %s46 = sphi 0, %s45
      %s62 = sphi 0, %s46
      %s66 = sphi 0, %s66
      %s68 = sphi 0, %s66
      %s69 = sphi 0, %s68
      %s83 = sphi 0, %s69
      %s87 = sphi 0, %s87
      %s89 = sphi 0, %s87
      %s90 = sphi 0, %s89
      %s104 = sphi 0, %s90
      %s108 = sphi 0, %s108
      %s110 = sphi 0, %s108
      %s111 = sphi 0, %s110
      %s125 = sphi 0, %s111
      %s129 = sphi 0, %s129
      %s131 = sphi 0, %s129
      %s132 = sphi 0, %s131
      %s146 = sphi 0, %s132
      %s150 = sphi 0, %s150
      %s152 = sphi 0, %s150
      %s153 = sphi 0, %s152
      %s167 = sphi 0, %s153
      %s173 = sphi 0, %s175
      %s176 = sphi 0, %s173
      %s177 = sphi 0, %s176
      %s193 = sphi 0, %s177
      %s199 = sphi 0, %s201
      %s202 = sphi 0, %s199
      %s203 = sphi 0, %s202
      %s219 = sphi 0, %s203
      %s225 = sphi 0, %s227
      %s228 = sphi 0, %s225
      %s229 = sphi 0, %s228
      %s245 = sphi 0, %s229
    $region4: #{tpu_custom_call.1} parent=1 // loop_header_branch
      %35 = sbr.rel (%p33) target = $region8
    $region5: #{tpu_custom_call.1} parent=1 // loop_body
      %s37 = ssub.s32 %s32, 1
      %s38 = ssub.s32 %s32, 2
      %s39 = sadd.s32 %s32, 1
      %s40 = ssub.s32 %s32, %s39
      %p41 = scmp.eq.s32.totalorder %s40, 0
      %s43 = sadd.s32 %s42, 1
      %s44 = scalar_select %p41, %s42, %s43
      %p47 = pneg %p41
      %p48 = scmp.eq.s32.totalorder %s32, 1
      %p49 = por %p47, %p48
      %p50 = scmp.ne.s32.totalorder %s42, %s45
      %p51 = scmp.eq.s32.totalorder %s32, 0
      %p52 = por %p50, %p51
      %p53 = scmp.ne.s32.totalorder %s42, %s45
      %p54 = scmp.eq.s32.totalorder %s37, 1
      %p55 = por %p53, %p54
      %p56 = scmp.ne.s32.totalorder %s45, %s46
      %p57 = scmp.eq.s32.totalorder %s37, 0
      %p58 = por %p56, %p57
      %p59 = scmp.ne.s32.totalorder %s45, %s46
      %p60 = scmp.eq.s32.totalorder %s38, 1
      %p61 = por %p59, %p60
      %p63 = scmp.ne.s32.totalorder %s46, %s62
      %p64 = scmp.eq.s32.totalorder %s38, 0
      %p65 = por %p63, %p64
      %s67 = sadd.s32 %s66, 1
      %p70 = scmp.eq.s32.totalorder %s32, 1
      %p71 = scmp.ne.s32.totalorder %s66, %s68
      %p72 = scmp.eq.s32.totalorder %s32, 0
      %p73 = por %p71, %p72
      %p74 = scmp.ne.s32.totalorder %s66, %s68
      %p75 = scmp.eq.s32.totalorder %s37, 1
      %p76 = por %p74, %p75
      %p77 = scmp.ne.s32.totalorder %s68, %s69
      %p78 = scmp.eq.s32.totalorder %s37, 0
      %p79 = por %p77, %p78
      %p80 = scmp.ne.s32.totalorder %s68, %s69
      %p81 = scmp.eq.s32.totalorder %s38, 1
      %p82 = por %p80, %p81
      %p84 = scmp.ne.s32.totalorder %s69, %s83
      %p85 = scmp.eq.s32.totalorder %s38, 0
      %p86 = por %p84, %p85
      %s88 = sadd.s32 %s87, 1
      %p91 = scmp.eq.s32.totalorder %s32, 1
      %p92 = scmp.ne.s32.totalorder %s87, %s89
      %p93 = scmp.eq.s32.totalorder %s32, 0
      %p94 = por %p92, %p93
      %p95 = scmp.ne.s32.totalorder %s87, %s89
      %p96 = scmp.eq.s32.totalorder %s37, 1
      %p97 = por %p95, %p96
      %p98 = scmp.ne.s32.totalorder %s89, %s90
      %p99 = scmp.eq.s32.totalorder %s37, 0
      %p100 = por %p98, %p99
      %p101 = scmp.ne.s32.totalorder %s89, %s90
      %p102 = scmp.eq.s32.totalorder %s38, 1
      %p103 = por %p101, %p102
      %p105 = scmp.ne.s32.totalorder %s90, %s104
      %p106 = scmp.eq.s32.totalorder %s38, 0
      %p107 = por %p105, %p106
      %s109 = sadd.s32 %s108, 1
      %p112 = scmp.eq.s32.totalorder %s32, 1
      %p113 = scmp.ne.s32.totalorder %s108, %s110
      %p114 = scmp.eq.s32.totalorder %s32, 0
      %p115 = por %p113, %p114
      %p116 = scmp.ne.s32.totalorder %s108, %s110
      %p117 = scmp.eq.s32.totalorder %s37, 1
      %p118 = por %p116, %p117
      %p119 = scmp.ne.s32.totalorder %s110, %s111
      %p120 = scmp.eq.s32.totalorder %s37, 0
      %p121 = por %p119, %p120
      %p122 = scmp.ne.s32.totalorder %s110, %s111
      %p123 = scmp.eq.s32.totalorder %s38, 1
      %p124 = por %p122, %p123
      %p126 = scmp.ne.s32.totalorder %s111, %s125
      %p127 = scmp.eq.s32.totalorder %s38, 0
      %p128 = por %p126, %p127
      %s130 = sadd.s32 %s129, 1
      %p133 = scmp.eq.s32.totalorder %s32, 1
      %p134 = scmp.ne.s32.totalorder %s129, %s131
      %p135 = scmp.eq.s32.totalorder %s32, 0
      %p136 = por %p134, %p135
      %p137 = scmp.ne.s32.totalorder %s129, %s131
      %p138 = scmp.eq.s32.totalorder %s37, 1
      %p139 = por %p137, %p138
      %p140 = scmp.ne.s32.totalorder %s131, %s132
      %p141 = scmp.eq.s32.totalorder %s37, 0
      %p142 = por %p140, %p141
      %p143 = scmp.ne.s32.totalorder %s131, %s132
      %p144 = scmp.eq.s32.totalorder %s38, 1
      %p145 = por %p143, %p144
      %p147 = scmp.ne.s32.totalorder %s132, %s146
      %p148 = scmp.eq.s32.totalorder %s38, 0
      %p149 = por %p147, %p148
      %s151 = sadd.s32 %s150, 1
      %p154 = scmp.eq.s32.totalorder %s32, 1
      %p155 = scmp.ne.s32.totalorder %s150, %s152
      %p156 = scmp.eq.s32.totalorder %s32, 0
      %p157 = por %p155, %p156
      %p158 = scmp.ne.s32.totalorder %s150, %s152
      %p159 = scmp.eq.s32.totalorder %s37, 1
      %p160 = por %p158, %p159
      %p161 = scmp.ne.s32.totalorder %s152, %s153
      %p162 = scmp.eq.s32.totalorder %s37, 0
      %p163 = por %p161, %p162
      %p164 = scmp.ne.s32.totalorder %s152, %s153
      %p165 = scmp.eq.s32.totalorder %s38, 1
      %p166 = por %p164, %p165
      %p168 = scmp.ne.s32.totalorder %s153, %s167
      %p169 = scmp.eq.s32.totalorder %s38, 0
      %p170 = por %p168, %p169
      %s171 = ssub.s32 %s32, %s39
      %p172 = scmp.eq.s32.totalorder %s171, 0
      %s174 = sadd.s32 %s173, 1
      %s175 = scalar_select %p172, %s173, %s174
      %p178 = pneg %p172
      %p179 = scmp.eq.s32.totalorder %s32, 1
      %p180 = por %p178, %p179
      %p181 = scmp.ne.s32.totalorder %s173, %s176
      %p182 = scmp.eq.s32.totalorder %s32, 0
      %p183 = por %p181, %p182
      %p184 = scmp.ne.s32.totalorder %s173, %s176
      %p185 = scmp.eq.s32.totalorder %s37, 1
      %p186 = por %p184, %p185
      %p187 = scmp.ne.s32.totalorder %s176, %s177
      %p188 = scmp.eq.s32.totalorder %s37, 0
      %p189 = por %p187, %p188
      %p190 = scmp.ne.s32.totalorder %s176, %s177
      %p191 = scmp.eq.s32.totalorder %s38, 1
      %p192 = por %p190, %p191
      %p194 = scmp.ne.s32.totalorder %s177, %s193
      %p195 = scmp.eq.s32.totalorder %s38, 0
      %p196 = por %p194, %p195
      %s197 = ssub.s32 %s32, %s39
      %p198 = scmp.eq.s32.totalorder %s197, 0
      %s200 = sadd.s32 %s199, 1
      %s201 = scalar_select %p198, %s199, %s200
      %p204 = pneg %p198
      %p205 = scmp.eq.s32.totalorder %s32, 1
      %p206 = por %p204, %p205
      %p207 = scmp.ne.s32.totalorder %s199, %s202
      %p208 = scmp.eq.s32.totalorder %s32, 0
      %p209 = por %p207, %p208
      %p210 = scmp.ne.s32.totalorder %s199, %s202
      %p211 = scmp.eq.s32.totalorder %s37, 1
      %p212 = por %p210, %p211
      %p213 = scmp.ne.s32.totalorder %s202, %s203
      %p214 = scmp.eq.s32.totalorder %s37, 0
      %p215 = por %p213, %p214
      %p216 = scmp.ne.s32.totalorder %s202, %s203
      %p217 = scmp.eq.s32.totalorder %s38, 1
      %p218 = por %p216, %p217
      %p220 = scmp.ne.s32.totalorder %s203, %s219
      %p221 = scmp.eq.s32.totalorder %s38, 0
      %p222 = por %p220, %p221
      %s223 = ssub.s32 %s32, %s39
      %p224 = scmp.eq.s32.totalorder %s223, 0
      %s226 = sadd.s32 %s225, 1
      %s227 = scalar_select %p224, %s225, %s226
      %p230 = pneg %p224
      %p231 = scmp.eq.s32.totalorder %s32, 1
      %p232 = por %p230, %p231
      %p233 = scmp.ne.s32.totalorder %s225, %s228
      %p234 = scmp.eq.s32.totalorder %s32, 0
      %p235 = por %p233, %p234
      %p236 = scmp.ne.s32.totalorder %s225, %s228
      %p237 = scmp.eq.s32.totalorder %s37, 1
      %p238 = por %p236, %p237
      %p239 = scmp.ne.s32.totalorder %s228, %s229
      %p240 = scmp.eq.s32.totalorder %s37, 0
      %p241 = por %p239, %p240
      %p242 = scmp.ne.s32.totalorder %s228, %s229
      %p243 = scmp.eq.s32.totalorder %s38, 1
      %p244 = por %p242, %p243
      %p246 = scmp.ne.s32.totalorder %s229, %s245
      %p247 = scmp.eq.s32.totalorder %s38, 0
      %p248 = por %p246, %p247
      %p249 = scmp.le.s32.totalorder 1, %s32
      %p250 = scmp.lt.s32.totalorder %s32, 3
      %p251 = pnand %p249, %p250
      %p252 = pneg %p251
      // Predicated region
      $region9: #{tpu_custom_call.1} parent=5 // pred_check
        _
      $region10: #{tpu_custom_call.1} parent=5 // pred_check_branch
        %254 = sbr.rel (%p251) target = $region12
      $region11: #{tpu_custom_call.1} parent=5 // pred_region
        %s255 = ssub.s32 %s32, 1
        // Predicated region
        $region13: #{tpu_custom_call.1} parent=11 // pred_check
          %p256 = pneg %p79
        $region14: #{tpu_custom_call.1} parent=11 // pred_check_branch
          %258 = sbr.rel (%p256) target = $region16
        $region15: #{tpu_custom_call.1} parent=11 // pred_region
          %s260 = ssub.s32 128, 128
          %261 = vsyncadd [#allocation9], %s260
          %s263 = sshll.u32 [#allocation8], 4
          %s264 = int_to_ptr.vmem [resolvable:$true] %s263
          %266 = dma.hbm_to_vmem [thread:$0]  %s2, 128, %s264, [#allocation9]
        $region16: #{tpu_custom_call.1} parent=11 // pred_fallthru
          _
        // Predicated region
        $region17: #{tpu_custom_call.1} parent=11 // pred_check
          %p267 = pneg %p100
        $region18: #{tpu_custom_call.1} parent=11 // pred_check_branch
          %269 = sbr.rel (%p267) target = $region20
        $region19: #{tpu_custom_call.1} parent=11 // pred_region
          %s271 = ssub.s32 128, 128
          %272 = vsyncadd [#allocation9], %s271
          %s274 = sshll.u32 [#allocation10], 4
          %s275 = int_to_ptr.vmem [resolvable:$true] %s274
          %277 = dma.hbm_to_vmem [thread:$0]  %s3, 128, %s275, [#allocation9]
        $region20: #{tpu_custom_call.1} parent=11 // pred_fallthru
          _
        // Predicated region
        $region21: #{tpu_custom_call.1} parent=11 // pred_check
          %p278 = pneg %p121
        $region22: #{tpu_custom_call.1} parent=11 // pred_check_branch
          %280 = sbr.rel (%p278) target = $region24
        $region23: #{tpu_custom_call.1} parent=11 // pred_region
          %s282 = ssub.s32 64, 64
          %283 = vsyncadd [#allocation12], %s282
          %s285 = sshll.u32 [#allocation11], 4
          %s286 = int_to_ptr.vmem [resolvable:$true] %s285
          %288 = dma.hbm_to_vmem [thread:$0]  %s4, 64, %s286, [#allocation12]
        $region24: #{tpu_custom_call.1} parent=11 // pred_fallthru
          _
        // Predicated region
        $region25: #{tpu_custom_call.1} parent=11 // pred_check
          %p289 = pneg %p142
        $region26: #{tpu_custom_call.1} parent=11 // pred_check_branch
          %291 = sbr.rel (%p289) target = $region28
        $region27: #{tpu_custom_call.1} parent=11 // pred_region
          %s293 = ssub.s32 64, 64
          %294 = vsyncadd [#allocation12], %s293
          %s296 = sshll.u32 [#allocation13], 4
          %s297 = int_to_ptr.vmem [resolvable:$true] %s296
          %299 = dma.hbm_to_vmem [thread:$0]  %s5, 64, %s297, [#allocation12]
        $region28: #{tpu_custom_call.1} parent=11 // pred_fallthru
          _
        // Predicated region
        $region29: #{tpu_custom_call.1} parent=11 // pred_check
          %p300 = pneg %p163
        $region30: #{tpu_custom_call.1} parent=11 // pred_check_branch
          %302 = sbr.rel (%p300) target = $region32
        $region31: #{tpu_custom_call.1} parent=11 // pred_region
          %s304 = ssub.s32 48, 48
          %305 = vsyncadd [#allocation15], %s304
          %s307 = sshll.u32 [#allocation14], 4
          %s308 = int_to_ptr.vmem [resolvable:$true] %s307
          %310 = dma.hbm_to_vmem [thread:$0]  %s6, 48, %s308, [#allocation15]
        $region32: #{tpu_custom_call.1} parent=11 // pred_fallthru
          _
      $region12: #{tpu_custom_call.1} parent=5 // pred_fallthru
        _
      %p311 = scmp.lt.s32.totalorder %s32, 2
      // Predicated region
      $region33: #{tpu_custom_call.1} parent=5 // pred_check
        %p312 = pneg %p311
      $region34: #{tpu_custom_call.1} parent=5 // pred_check_branch
        %314 = sbr.rel (%p312) target = $region36
      $region35: #{tpu_custom_call.1} parent=5 // pred_region
        // Predicated region
        $region37: #{tpu_custom_call.1} parent=35 // pred_check
          %p315 = pneg %p52
        $region38: #{tpu_custom_call.1} parent=35 // pred_check_branch
          %317 = sbr.rel (%p315) target = $region40
        $region39: #{tpu_custom_call.1} parent=35 // pred_region
          %s318 = sand.u32 %s42, 1
          %s319 = scalar_lea.sflag [#allocation6], %s318
          %s320 = sand.u32 %s42, 1
          %s321 = smul.addr %s320, 12
          %s322 = scalar_lea.vmem [#allocation5], %s321
          %s324 = ssub.s32 192, 192
          %325 = vsyncadd %s319, %s324
          %s326 = smul.addr %s32, 3
          %s327 = smul.addr %s326, 64
          %s328 = scalar_lea.hbm %s1, %s327
          %s330 = sshll.u32 %s322, 4
          %s331 = int_to_ptr.vmem [resolvable:$true] %s330
          %333 = dma.hbm_to_vmem [thread:$0]  %s328, 192, %s331, %s319
        $region40: #{tpu_custom_call.1} parent=35 // pred_fallthru
          _
      $region36: #{tpu_custom_call.1} parent=5 // pred_fallthru
        _
      %p334 = scmp.le.s32.totalorder 1, %s32
      %p335 = scmp.lt.s32.totalorder %s32, 3
      %p336 = pnand %p334, %p335
      %p337 = pneg %p336
      // Predicated region
      $region41: #{tpu_custom_call.1} parent=5 // pred_check
        _
      $region42: #{tpu_custom_call.1} parent=5 // pred_check_branch
        %339 = sbr.rel (%p336) target = $region44
      $region43: #{tpu_custom_call.1} parent=5 // pred_region
        %s340 = ssub.s32 %s32, 1
        %s341 = sand.u32 %s45, 1
        %s342 = scalar_lea.sflag [#allocation6], %s341
        %s343 = sand.u32 %s45, 1
        %s344 = smul.addr %s343, 12
        %s345 = scalar_lea.vmem [#allocation5], %s344
        // Predicated region
        $region45: #{tpu_custom_call.1} parent=43 // pred_check
          %p346 = pneg %p58
        $region46: #{tpu_custom_call.1} parent=43 // pred_check_branch
          %348 = sbr.rel (%p346) target = $region48
        $region47: #{tpu_custom_call.1} parent=43 // pred_region
          %349 = dma.done %s342, 192
        $region48: #{tpu_custom_call.1} parent=43 // pred_fallthru
          _
        // Predicated region
        $region49: #{tpu_custom_call.1} parent=43 // pred_check
          %p350 = pneg %p79
        $region50: #{tpu_custom_call.1} parent=43 // pred_check_branch
          %352 = sbr.rel (%p350) target = $region52
        $region51: #{tpu_custom_call.1} parent=43 // pred_region
          %353 = dma.done [#allocation9], 128
        $region52: #{tpu_custom_call.1} parent=43 // pred_fallthru
          _
        // Predicated region
        $region53: #{tpu_custom_call.1} parent=43 // pred_check
          %p354 = pneg %p100
        $region54: #{tpu_custom_call.1} parent=43 // pred_check_branch
          %356 = sbr.rel (%p354) target = $region56
        $region55: #{tpu_custom_call.1} parent=43 // pred_region
          %357 = dma.done [#allocation9], 128
        $region56: #{tpu_custom_call.1} parent=43 // pred_fallthru
          _
        // Predicated region
        $region57: #{tpu_custom_call.1} parent=43 // pred_check
          %p358 = pneg %p121
        $region58: #{tpu_custom_call.1} parent=43 // pred_check_branch
          %360 = sbr.rel (%p358) target = $region60
        $region59: #{tpu_custom_call.1} parent=43 // pred_region
          %361 = dma.done [#allocation12], 64
        $region60: #{tpu_custom_call.1} parent=43 // pred_fallthru
          _
        // Predicated region
        $region61: #{tpu_custom_call.1} parent=43 // pred_check
          %p362 = pneg %p142
        $region62: #{tpu_custom_call.1} parent=43 // pred_check_branch
          %364 = sbr.rel (%p362) target = $region64
        $region63: #{tpu_custom_call.1} parent=43 // pred_region
          %365 = dma.done [#allocation12], 64
        $region64: #{tpu_custom_call.1} parent=43 // pred_fallthru
          _
        // Predicated region
        $region65: #{tpu_custom_call.1} parent=43 // pred_check
          %p366 = pneg %p163
        $region66: #{tpu_custom_call.1} parent=43 // pred_check_branch
          %368 = sbr.rel (%p366) target = $region68
        $region67: #{tpu_custom_call.1} parent=43 // pred_region
          %369 = dma.done [#allocation15], 48
        $region68: #{tpu_custom_call.1} parent=43 // pred_fallthru
          _
        %s370 = sand.u32 %s45, 1
        %s371 = scalar_lea.sflag [#allocation6], %s370
        %s372 = sand.u32 %s45, 1
        %s373 = smul.addr %s372, 12
        %s374 = scalar_lea.vmem [#allocation5], %s373
        %p375 = pneg %p58
        %p376 = pneg %p55
        %p377 = pneg %p79
        %p378 = pneg %p76
        %p379 = pneg %p100
        %p380 = pneg %p97
        %p381 = pneg %p121
        %p382 = pneg %p118
        %p383 = pneg %p142
        %p384 = pneg %p139
        %p385 = pneg %p163
        %p386 = pneg %p160
        %p387 = pneg %p189
        %p388 = pneg %p186
        %s389 = sand.u32 %s176, 1
        %s390 = scalar_lea.sflag [#allocation7], %s389
        %s391 = sand.u32 %s176, 1
        %s392 = smul.addr %s391, 12
        %s393 = scalar_lea.vmem [#allocation16], %s392
        %p394 = pneg %p215
        %p395 = pneg %p212
        %s396 = sand.u32 %s37, 1
        %s397 = scalar_lea.sflag [#allocation18], %s396
        %s398 = sand.u32 %s202, 1
        %s399 = scalar_lea.vmem [#allocation17], %s398
        %p400 = pneg %p241
        %p401 = pneg %p238
        %s402 = sand.u32 %s37, 1
        %s403 = scalar_lea.sflag [#allocation18], %s402
        %s404 = sand.u32 %s228, 1
        %s405 = scalar_lea.vmem [#allocation19], %s404
        %v406 = vld [vmem:[%s345] sm:$0x77]
        %v407 = vld [vmem:[%s345 + $0x8] sm:$0x7]
        %v408 = vld [vmem:[#allocation14] sm:$0x7]
        %409 = vst [vmem:[#allocation2] sm:$0xff] 0.0
        %410 = vst [vmem:[#allocation2 + $0x8] sm:$0xff] 0.0
        %411 = vst [vmem:[#allocation2 + $0x10] sm:$0xff] 0.0
        %v413 = vcombine.high %v406, %v406
        %415 = vst [vmem:[#allocation2] sm:$0x7] %v406
        %416 = vst [vmem:[#allocation2 + $0x8] sm:$0x7] %v413
        %417 = vst [vmem:[#allocation2 + $0x10] sm:$0x7] %v407
        %v418 = vld [vmem:[#allocation2] sm:$0xff]
        %v419 = vld [vmem:[#allocation2 + $0x8] sm:$0xff]
        %v420 = vld [vmem:[#allocation2 + $0x10] sm:$0xff]
        %421 = vrot.lane.b32.xlu0 %v418, 19
        %v422 = vpop.permute.xlu0 %421
        %423 = vrot.lane.b32.xlu0 %v419, 19
        %v424 = vpop.permute.xlu0 %423
        %425 = vrot.lane.b32.xlu0 %v420, 19
        %v426 = vpop.permute.xlu0 %425
        %v427 = vlaneseq
        %v428 = vand.u32 %v427, 127
        %vm429 = vcmp.lt.s32.totalorder %v428, 19
        %v430 = vsel %vm429, %v424, %v426
        %v431 = vsel %vm429, %v422, %v424
        %v432 = vsel %vm429, %v426, %v422
        %433 = vrot.lane.b32.xlu0 %v418, 18
        %v434 = vpop.permute.xlu0 %433
        %435 = vrot.lane.b32.xlu0 %v419, 18
        %v436 = vpop.permute.xlu0 %435
        %437 = vrot.lane.b32.xlu0 %v420, 18
        %v438 = vpop.permute.xlu0 %437
        %vm439 = vcmp.lt.s32.totalorder %v428, 18
        %v440 = vsel %vm439, %v436, %v438
        %v441 = vsel %vm439, %v434, %v436
        %v442 = vsel %vm439, %v438, %v434
        %443 = vrot.lane.b32.xlu0 %v418, 17
        %v444 = vpop.permute.xlu0 %443
        %445 = vrot.lane.b32.xlu0 %v419, 17
        %v446 = vpop.permute.xlu0 %445
        %447 = vrot.lane.b32.xlu0 %v420, 17
        %v448 = vpop.permute.xlu0 %447
        %vm449 = vcmp.lt.s32.totalorder %v428, 17
        %v450 = vsel %vm449, %v446, %v448
        %v451 = vsel %vm449, %v444, %v446
        %v452 = vsel %vm449, %v448, %v444
        %453 = vrot.lane.b32.xlu0 %v418, 1
        %v454 = vpop.permute.xlu0 %453
        %455 = vrot.lane.b32.xlu0 %v419, 1
        %v456 = vpop.permute.xlu0 %455
        %457 = vrot.lane.b32.xlu0 %v420, 1
        %v458 = vpop.permute.xlu0 %457
        %vm459 = vcmp.lt.s32.totalorder %v428, 1
        %v460 = vsel %vm459, %v456, %v458
        %v461 = vsel %vm459, %v454, %v456
        %v462 = vsel %vm459, %v458, %v454
        %463 = vrot.lane.b32.xlu0 %v418, 127
        %v464 = vpop.permute.xlu0 %463
        %465 = vrot.lane.b32.xlu0 %v419, 127
        %v466 = vpop.permute.xlu0 %465
        %467 = vrot.lane.b32.xlu0 %v420, 127
        %v468 = vpop.permute.xlu0 %467
        %vm469 = vcmp.lt.s32.totalorder %v428, 127
        %v470 = vsel %vm469, %v466, %v468
        %v471 = vsel %vm469, %v464, %v466
        %v472 = vsel %vm469, %v468, %v464
        %473 = vrot.lane.b32.xlu0 %v418, 111
        %v474 = vpop.permute.xlu0 %473
        %475 = vrot.lane.b32.xlu0 %v419, 111
        %v476 = vpop.permute.xlu0 %475
        %477 = vrot.lane.b32.xlu0 %v420, 111
        %v478 = vpop.permute.xlu0 %477
        %vm479 = vcmp.lt.s32.totalorder %v428, 111
        %v480 = vsel %vm479, %v476, %v478
        %v481 = vsel %vm479, %v474, %v476
        %v482 = vsel %vm479, %v478, %v474
        %483 = vrot.lane.b32.xlu0 %v418, 110
        %v484 = vpop.permute.xlu0 %483
        %485 = vrot.lane.b32.xlu0 %v419, 110
        %v486 = vpop.permute.xlu0 %485
        %487 = vrot.lane.b32.xlu0 %v420, 110
        %v488 = vpop.permute.xlu0 %487
        %vm489 = vcmp.lt.s32.totalorder %v428, 110
        %v490 = vsel %vm489, %v486, %v488
        %v491 = vsel %vm489, %v484, %v486
        %v492 = vsel %vm489, %v488, %v484
        %493 = vrot.lane.b32.xlu0 %v418, 109
        %v494 = vpop.permute.xlu0 %493
        %495 = vrot.lane.b32.xlu0 %v419, 109
        %v496 = vpop.permute.xlu0 %495
        %497 = vrot.lane.b32.xlu0 %v420, 109
        %v498 = vpop.permute.xlu0 %497
        %vm499 = vcmp.lt.s32.totalorder %v428, 109
        %v500 = vsel %vm499, %v496, %v498
        %v501 = vsel %vm499, %v494, %v496
        %v502 = vsel %vm499, %v498, %v494
        %v503 = vld [vmem:[#allocation8] sm:$0xff]
        %v504 = vld [vmem:[#allocation10] sm:$0xff]
        %506 = vset.pattern.permute.xlu0 0
        %507 = vperm.xlu0 %506, %v504
        %v508 = vpop.permute.xlu0 %507
        %vm510 = vcmask 588800
        %v512 = vsel %vm510, %v503, 0
        %514 = vmatprep.subr.mxu0 %v431
        %515 = vmatpush1.msra.mxu0 %v432
        %516 = vmatprep.subr.mxu0 %v441
        %517 = vmatpush1.msra.mxu0 %v442
        %518 = vmatprep.subr.mxu0 %v451
        %519 = vmatpush1.msra.mxu0 %v452
        %520 = vmatprep.subr.mxu0 %v461
        %521 = vmatpush1.msra.mxu0 %v462
        %522 = vmatprep.subr.mxu0 %v419
        %523 = vmatpush1.msra.mxu0 %v418
        %524 = vmatprep.subr.mxu0 %v470
        %525 = vmatpush1.msra.mxu0 %v471
        %526 = vmatprep.subr.mxu0 %v480
        %527 = vmatpush1.msra.mxu0 %v481
        %528 = vmatprep.subr.mxu0 %v490
        %529 = vmatpush1.msra.mxu0 %v491
        %530 = vmatprep.subr.mxu0 %v500
        %531 = vmatpush1.msra.mxu0 %v501
        %532 = vmatprep.subr.mxu0 0.0
        %533 = vmatpush1.msra.mxu0 0.0
        %534 = vmatprep.subr.mxu0 0.0
        %535 = vmatpush1.msra.mxu0 0.0
        %536 = vmatprep.subr.mxu0 0.0
        %537 = vmatpush1.msra.mxu0 0.0
        %538 = vmatprep.subr.mxu0 0.0
        %539 = vmatpush1.msra.mxu0 0.0
        %540 = vmatprep.subr.mxu0 0.0
        %541 = vmatpush1.msra.mxu0 0.0
        %542 = vmatprep.subr.mxu0 0.0
        %543 = vmatpush1.msra.mxu0 0.0
        %544 = vmatprep.subr.mxu0 0.0
        %545 = vmatpush1.msra.mxu0 0.0
        %546 = vmatprep.subr.mxu0 0.0
        %547 = vmatpush1.msra.mxu0 0.0
        %548 = vmatprep.subr.mxu0 0.0
        %549 = vmatpush1.msra.mxu0 0.0
        %550 = vmatprep.subr.mxu0 0.0
        %551 = vmatpush1.msra.mxu0 0.0
        %552 = vmatprep.subr.mxu0 0.0
        %553 = vmatpush1.msra.mxu0 0.0
        %554 = vmatprep.subr.mxu0 0.0
        %555 = vmatpush1.msra.mxu0 0.0
        %556 = vmatprep.subr.mxu0 0.0
        %557 = vmatpush1.msra.mxu0 0.0
        %558 = vmatprep.subr.mxu0 0.0
        %559 = vmatpush1.msra.mxu0 0.0
        %560 = vmatprep.subr.mxu0 0.0
        %561 = vmatpush1.msra.mxu0 0.0
        %562 = vmatprep.subr.mxu0 0.0
        %563 = vmatpush1.msra.mxu0 0.0
        %564 = vmatprep.subr.mxu0 0.0
        %565 = vmatpush1.msra.mxu0 0.0
        %566 = vmatprep.subr.mxu0 0.0
        %567 = vmatpush1.msra.mxu0 0.0
        %568 = vmatprep.subr.mxu0 0.0
        %569 = vmatpush1.msra.mxu0 0.0
        %570 = vmatprep.subr.mxu0 0.0
        %571 = vmatpush1.msra.mxu0 0.0
        %572 = vmatprep.subr.mxu0 0.0
        %573 = vmatpush1.msra.mxu0 0.0
        %574 = vmatprep.subr.mxu0 0.0
        %575 = vmatpush1.msra.mxu0 0.0
        %576 = vmatprep.subr.mxu0 0.0
        %577 = vmatpush1.msra.mxu0 0.0
        %578 = vmatprep.mubr.f32.mxu0 0.0
        %579 = vmatmul.mubr.f32.gmra.mrb[0].mxu0 %v512
        %v580 = vpop.f32.mrb[0].mxu0
        %v581 = vadd.f32 %v508, %v580
        %v582 = vpop.f32.mrb[0].mxu0
        %v583 = vadd.f32 %v508, %v582
        %584 = vdwg.mxu0
        %585 = vmatprep.subr.mxu0 0.0
        %586 = vmatpush1.msra.mxu0 %v430
        %587 = vmatprep.subr.mxu0 0.0
        %588 = vmatpush1.msra.mxu0 %v440
        %589 = vmatprep.subr.mxu0 0.0
        %590 = vmatpush1.msra.mxu0 %v450
        %591 = vmatprep.subr.mxu0 0.0
        %592 = vmatpush1.msra.mxu0 %v460
        %593 = vmatprep.subr.mxu0 0.0
        %594 = vmatpush1.msra.mxu0 %v420
        %595 = vmatprep.subr.mxu0 0.0
        %596 = vmatpush1.msra.mxu0 %v472
        %597 = vmatprep.subr.mxu0 0.0
        %598 = vmatpush1.msra.mxu0 %v482
        %599 = vmatprep.subr.mxu0 0.0
        %600 = vmatpush1.msra.mxu0 %v492
        %601 = vmatprep.subr.mxu0 0.0
        %602 = vmatpush1.msra.mxu0 %v502
        %603 = vmatprep.subr.mxu0 0.0
        %604 = vmatpush1.msra.mxu0 0.0
        %605 = vmatprep.subr.mxu0 0.0
        %606 = vmatpush1.msra.mxu0 0.0
        %607 = vmatprep.subr.mxu0 0.0
        %608 = vmatpush1.msra.mxu0 0.0
        %609 = vmatprep.subr.mxu0 0.0
        %610 = vmatpush1.msra.mxu0 0.0
        %611 = vmatprep.subr.mxu0 0.0
        %612 = vmatpush1.msra.mxu0 0.0
        %613 = vmatprep.subr.mxu0 0.0
        %614 = vmatpush1.msra.mxu0 0.0
        %615 = vmatprep.subr.mxu0 0.0
        %616 = vmatpush1.msra.mxu0 0.0
        %617 = vmatprep.subr.mxu0 0.0
        %618 = vmatpush1.msra.mxu0 0.0
        %619 = vmatprep.subr.mxu0 0.0
        %620 = vmatpush1.msra.mxu0 0.0
        %621 = vmatprep.subr.mxu0 0.0
        %622 = vmatpush1.msra.mxu0 0.0
        %623 = vmatprep.subr.mxu0 0.0
        %624 = vmatpush1.msra.mxu0 0.0
        %625 = vmatprep.subr.mxu0 0.0
        %626 = vmatpush1.msra.mxu0 0.0
        %627 = vmatprep.subr.mxu0 0.0
        %628 = vmatpush1.msra.mxu0 0.0
        %629 = vmatprep.subr.mxu0 0.0
        %630 = vmatpush1.msra.mxu0 0.0
        %631 = vmatprep.subr.mxu0 0.0
        %632 = vmatpush1.msra.mxu0 0.0
        %633 = vmatprep.subr.mxu0 0.0
        %634 = vmatpush1.msra.mxu0 0.0
        %635 = vmatprep.subr.mxu0 0.0
        %636 = vmatpush1.msra.mxu0 0.0
        %637 = vmatprep.subr.mxu0 0.0
        %638 = vmatpush1.msra.mxu0 0.0
        %639 = vmatprep.subr.mxu0 0.0
        %640 = vmatpush1.msra.mxu0 0.0
        %641 = vmatprep.subr.mxu0 0.0
        %642 = vmatpush1.msra.mxu0 0.0
        %643 = vmatprep.subr.mxu0 0.0
        %644 = vmatpush1.msra.mxu0 0.0
        %645 = vmatprep.subr.mxu0 0.0
        %646 = vmatpush1.msra.mxu0 0.0
        %647 = vmatprep.subr.mxu0 0.0
        %648 = vmatpush1.msra.mxu0 0.0
        %649 = vmatprep.mubr.f32.mxu0 0.0
        %650 = vmatmul.mubr.f32.gmra.mrb[0].mxu0 %v512
        %v651 = vpop.f32.mrb[0].mxu0
        %v652 = vadd.f32 %v508, %v651
        %v653 = vpop.f32.mrb[0].mxu0
        %654 = vdwg.mxu0
        %v655 = vmax.f32 %v581, 0.0
        %v656 = vmax.f32 %v583, 0.0
        %v657 = vmax.f32 %v652, 0.0
        %v659 = vlaneseq
        %v660 = vshrl.u32 %v659, 7
        %v661 = vsub.s32 0, %v660
        %v662 = vrot.slane %v408, %v661
        %v663 = vlaneseq
        %v664 = vshrl.u32 %v663, 7
        %v665 = vsub.s32 1, %v664
        %v666 = vrot.slane %v408, %v665
        %v667 = vlaneseq
        %v668 = vshrl.u32 %v667, 7
        %v669 = vsub.s32 2, %v668
        %v670 = vrot.slane %v408, %v669
        %v674 = vmul.f32 %v655, %v662
        %v675 = vmul.f32 %v656, %v666
        %v676 = vmul.f32 %v657, %v670
        %677 = vrot.lane.b32.xlu0 %v674, 19
        %v678 = vpop.permute.xlu0 %677
        %679 = vrot.lane.b32.xlu0 %v675, 19
        %v680 = vpop.permute.xlu0 %679
        %681 = vrot.lane.b32.xlu0 %v676, 19
        %v682 = vpop.permute.xlu0 %681
        %v683 = vsel %vm429, %v680, %v682
        %v684 = vsel %vm429, %v678, %v680
        %v685 = vsel %vm429, %v682, %v678
        %686 = vrot.lane.b32.xlu0 %v674, 18
        %v687 = vpop.permute.xlu0 %686
        %688 = vrot.lane.b32.xlu0 %v675, 18
        %v689 = vpop.permute.xlu0 %688
        %690 = vrot.lane.b32.xlu0 %v676, 18
        %v691 = vpop.permute.xlu0 %690
        %v692 = vsel %vm439, %v689, %v691
        %v693 = vsel %vm439, %v687, %v689
        %v694 = vsel %vm439, %v691, %v687
        %695 = vrot.lane.b32.xlu0 %v674, 17
        %v696 = vpop.permute.xlu0 %695
        %697 = vrot.lane.b32.xlu0 %v675, 17
        %v698 = vpop.permute.xlu0 %697
        %699 = vrot.lane.b32.xlu0 %v676, 17
        %v700 = vpop.permute.xlu0 %699
        %v701 = vsel %vm449, %v698, %v700
        %v702 = vsel %vm449, %v696, %v698
        %v703 = vsel %vm449, %v700, %v696
        %704 = vrot.lane.b32.xlu0 %v674, 1
        %v705 = vpop.permute.xlu0 %704
        %706 = vrot.lane.b32.xlu0 %v675, 1
        %v707 = vpop.permute.xlu0 %706
        %708 = vrot.lane.b32.xlu0 %v676, 1
        %v709 = vpop.permute.xlu0 %708
        %v710 = vsel %vm459, %v707, %v709
        %v711 = vsel %vm459, %v705, %v707
        %v712 = vsel %vm459, %v709, %v705
        %713 = vrot.lane.b32.xlu0 %v674, 127
        %v714 = vpop.permute.xlu0 %713
        %715 = vrot.lane.b32.xlu0 %v675, 127
        %v716 = vpop.permute.xlu0 %715
        %717 = vrot.lane.b32.xlu0 %v676, 127
        %v718 = vpop.permute.xlu0 %717
        %v719 = vsel %vm469, %v716, %v718
        %v720 = vsel %vm469, %v714, %v716
        %v721 = vsel %vm469, %v718, %v714
        %722 = vrot.lane.b32.xlu0 %v674, 111
        %v723 = vpop.permute.xlu0 %722
        %724 = vrot.lane.b32.xlu0 %v675, 111
        %v725 = vpop.permute.xlu0 %724
        %726 = vrot.lane.b32.xlu0 %v676, 111
        %v727 = vpop.permute.xlu0 %726
        %v728 = vsel %vm479, %v725, %v727
        %v729 = vsel %vm479, %v723, %v725
        %v730 = vsel %vm479, %v727, %v723
        %731 = vrot.lane.b32.xlu0 %v674, 110
        %v732 = vpop.permute.xlu0 %731
        %733 = vrot.lane.b32.xlu0 %v675, 110
        %v734 = vpop.permute.xlu0 %733
        %735 = vrot.lane.b32.xlu0 %v676, 110
        %v736 = vpop.permute.xlu0 %735
        %v737 = vsel %vm489, %v734, %v736
        %v738 = vsel %vm489, %v732, %v734
        %v739 = vsel %vm489, %v736, %v732
        %740 = vrot.lane.b32.xlu0 %v674, 109
        %v741 = vpop.permute.xlu0 %740
        %742 = vrot.lane.b32.xlu0 %v675, 109
        %v743 = vpop.permute.xlu0 %742
        %744 = vrot.lane.b32.xlu0 %v676, 109
        %v745 = vpop.permute.xlu0 %744
        %v746 = vsel %vm499, %v743, %v745
        %v747 = vsel %vm499, %v741, %v743
        %v748 = vsel %vm499, %v745, %v741
        %v749 = vld [vmem:[#allocation11] sm:$0x7]
        %v750 = vld [vmem:[#allocation13] sm:$0x7]
        %752 = vset.pattern.permute.xlu0 0
        %753 = vperm.xlu0 %752, %v750
        %v754 = vpop.permute.xlu0 %753
        %v757 = vsel %vm510, %v749, 0
        %759 = vmatprep.subr.mxu0 %v684
        %760 = vmatpush1.msra.mxu0 %v685
        %761 = vmatprep.subr.mxu0 %v693
        %762 = vmatpush1.msra.mxu0 %v694
        %763 = vmatprep.subr.mxu0 %v702
        %764 = vmatpush1.msra.mxu0 %v703
        %765 = vmatprep.subr.mxu0 %v711
        %766 = vmatpush1.msra.mxu0 %v712
        %767 = vmatprep.subr.mxu0 %v675
        %768 = vmatpush1.msra.mxu0 %v674
        %769 = vmatprep.subr.mxu0 %v719
        %770 = vmatpush1.msra.mxu0 %v720
        %771 = vmatprep.subr.mxu0 %v728
        %772 = vmatpush1.msra.mxu0 %v729
        %773 = vmatprep.subr.mxu0 %v737
        %774 = vmatpush1.msra.mxu0 %v738
        %775 = vmatprep.subr.mxu0 %v746
        %776 = vmatpush1.msra.mxu0 %v747
        %777 = vmatprep.subr.mxu0 0.0
        %778 = vmatpush1.msra.mxu0 0.0
        %779 = vmatprep.subr.mxu0 0.0
        %780 = vmatpush1.msra.mxu0 0.0
        %781 = vmatprep.subr.mxu0 0.0
        %782 = vmatpush1.msra.mxu0 0.0
        %783 = vmatprep.subr.mxu0 0.0
        %784 = vmatpush1.msra.mxu0 0.0
        %785 = vmatprep.subr.mxu0 0.0
        %786 = vmatpush1.msra.mxu0 0.0
        %787 = vmatprep.subr.mxu0 0.0
        %788 = vmatpush1.msra.mxu0 0.0
        %789 = vmatprep.subr.mxu0 0.0
        %790 = vmatpush1.msra.mxu0 0.0
        %791 = vmatprep.subr.mxu0 0.0
        %792 = vmatpush1.msra.mxu0 0.0
        %793 = vmatprep.subr.mxu0 0.0
        %794 = vmatpush1.msra.mxu0 0.0
        %795 = vmatprep.subr.mxu0 0.0
        %796 = vmatpush1.msra.mxu0 0.0
        %797 = vmatprep.subr.mxu0 0.0
        %798 = vmatpush1.msra.mxu0 0.0
        %799 = vmatprep.subr.mxu0 0.0
        %800 = vmatpush1.msra.mxu0 0.0
        %801 = vmatprep.subr.mxu0 0.0
        %802 = vmatpush1.msra.mxu0 0.0
        %803 = vmatprep.subr.mxu0 0.0
        %804 = vmatpush1.msra.mxu0 0.0
        %805 = vmatprep.subr.mxu0 0.0
        %806 = vmatpush1.msra.mxu0 0.0
        %807 = vmatprep.subr.mxu0 0.0
        %808 = vmatpush1.msra.mxu0 0.0
        %809 = vmatprep.subr.mxu0 0.0
        %810 = vmatpush1.msra.mxu0 0.0
        %811 = vmatprep.subr.mxu0 0.0
        %812 = vmatpush1.msra.mxu0 0.0
        %813 = vmatprep.subr.mxu0 0.0
        %814 = vmatpush1.msra.mxu0 0.0
        %815 = vmatprep.subr.mxu0 0.0
        %816 = vmatpush1.msra.mxu0 0.0
        %817 = vmatprep.subr.mxu0 0.0
        %818 = vmatpush1.msra.mxu0 0.0
        %819 = vmatprep.subr.mxu0 0.0
        %820 = vmatpush1.msra.mxu0 0.0
        %821 = vmatprep.subr.mxu0 0.0
        %822 = vmatpush1.msra.mxu0 0.0
        %823 = vmatprep.mubr.f32.mxu0 0.0
        %824 = vmatmul.mubr.f32.gmra.mrb[0].mxu0 %v757
        %v825 = vpop.f32.mrb[0].mxu0
        %v826 = vadd.f32 %v754, %v825
        %v827 = vpop.f32.mrb[0].mxu0
        %v828 = vadd.f32 %v754, %v827
        %829 = vdwg.mxu0
        %830 = vmatprep.subr.mxu0 0.0
        %831 = vmatpush1.msra.mxu0 %v683
        %832 = vmatprep.subr.mxu0 0.0
        %833 = vmatpush1.msra.mxu0 %v692
        %834 = vmatprep.subr.mxu0 0.0
        %835 = vmatpush1.msra.mxu0 %v701
        %836 = vmatprep.subr.mxu0 0.0
        %837 = vmatpush1.msra.mxu0 %v710
        %838 = vmatprep.subr.mxu0 0.0
        %839 = vmatpush1.msra.mxu0 %v676
        %840 = vmatprep.subr.mxu0 0.0
        %841 = vmatpush1.msra.mxu0 %v721
        %842 = vmatprep.subr.mxu0 0.0
        %843 = vmatpush1.msra.mxu0 %v730
        %844 = vmatprep.subr.mxu0 0.0
        %845 = vmatpush1.msra.mxu0 %v739
        %846 = vmatprep.subr.mxu0 0.0
        %847 = vmatpush1.msra.mxu0 %v748
        %848 = vmatprep.subr.mxu0 0.0
        %849 = vmatpush1.msra.mxu0 0.0
        %850 = vmatprep.subr.mxu0 0.0
        %851 = vmatpush1.msra.mxu0 0.0
        %852 = vmatprep.subr.mxu0 0.0
        %853 = vmatpush1.msra.mxu0 0.0
        %854 = vmatprep.subr.mxu0 0.0
        %855 = vmatpush1.msra.mxu0 0.0
        %856 = vmatprep.subr.mxu0 0.0
        %857 = vmatpush1.msra.mxu0 0.0
        %858 = vmatprep.subr.mxu0 0.0
        %859 = vmatpush1.msra.mxu0 0.0
        %860 = vmatprep.subr.mxu0 0.0
        %861 = vmatpush1.msra.mxu0 0.0
        %862 = vmatprep.subr.mxu0 0.0
        %863 = vmatpush1.msra.mxu0 0.0
        %864 = vmatprep.subr.mxu0 0.0
        %865 = vmatpush1.msra.mxu0 0.0
        %866 = vmatprep.subr.mxu0 0.0
        %867 = vmatpush1.msra.mxu0 0.0
        %868 = vmatprep.subr.mxu0 0.0
        %869 = vmatpush1.msra.mxu0 0.0
        %870 = vmatprep.subr.mxu0 0.0
        %871 = vmatpush1.msra.mxu0 0.0
        %872 = vmatprep.subr.mxu0 0.0
        %873 = vmatpush1.msra.mxu0 0.0
        %874 = vmatprep.subr.mxu0 0.0
        %875 = vmatpush1.msra.mxu0 0.0
        %876 = vmatprep.subr.mxu0 0.0
        %877 = vmatpush1.msra.mxu0 0.0
        %878 = vmatprep.subr.mxu0 0.0
        %879 = vmatpush1.msra.mxu0 0.0
        %880 = vmatprep.subr.mxu0 0.0
        %881 = vmatpush1.msra.mxu0 0.0
        %882 = vmatprep.subr.mxu0 0.0
        %883 = vmatpush1.msra.mxu0 0.0
        %884 = vmatprep.subr.mxu0 0.0
        %885 = vmatpush1.msra.mxu0 0.0
        %886 = vmatprep.subr.mxu0 0.0
        %887 = vmatpush1.msra.mxu0 0.0
        %888 = vmatprep.subr.mxu0 0.0
        %889 = vmatpush1.msra.mxu0 0.0
        %890 = vmatprep.subr.mxu0 0.0
        %891 = vmatpush1.msra.mxu0 0.0
        %892 = vmatprep.subr.mxu0 0.0
        %893 = vmatpush1.msra.mxu0 0.0
        %894 = vmatprep.mubr.f32.mxu0 0.0
        %895 = vmatmul.mubr.f32.gmra.mrb[0].mxu0 %v757
        %v896 = vpop.f32.mrb[0].mxu0
        %v897 = vadd.f32 %v754, %v896
        %v898 = vpop.f32.mrb[0].mxu0
        %899 = vdwg.mxu0
        %s900 = sld [smem:[#allocation4 + %s37]]
        %v901 = vstv %s900
        %v902 = vmul.f32 %v901, %v826
        %v903 = vmul.f32 %v901, %v828
        %v904 = vmul.f32 %v901, %v897
        %v905 = vsub.f32 1.0, %v901
        %v906 = vmul.f32 %v905, %v406
        %v907 = vmul.f32 %v905, %v407
        %v909 = vcombine.high %v906, %v906
        %v911 = vadd.f32 %v902, %v906
        %v912 = vadd.f32 %v903, %v909
        %v913 = vadd.f32 %v904, %v907
        %v914 = vmul.f32 %v911, %v662
        %v915 = vmul.f32 %v912, %v666
        %v916 = vmul.f32 %v913, %v670
        %v919 = vcombine.low %v914, %v915
        %921 = vst [vmem:[%s393] sm:$0x77] %v919
        %922 = vst [vmem:[%s393 + $0x8] sm:$0x7] %v916
        %v923 = vmul.f32 %v914, %v914
        %v924 = vmul.f32 %v915, %v915
        %v925 = vmul.f32 %v916, %v916
        %vm926 = vcmask 1042432
        %v927 = vsel %vm926, %v923, 0.0
        %v928 = vsel %vm926, %v924, 0.0
        %v929 = vadd.f32 %v927, %v928
        %v930 = vsel %vm926, %v925, 0.0
        %v931 = vadd.f32 %v929, %v930
        %932 = vadd.xlane.f32.xlu0 %v931
        %v933 = vpop.xlane.xlu0 %932
        %v934 = vrot.slane %v933, 4
        %v935 = vadd.f32 %v933, %v934
        %v936 = vrot.slane %v935, 2
        %v937 = vadd.f32 %v935, %v936
        %v938 = vrot.slane %v937, 1
        %v939 = vadd.f32 %v937, %v938
        %s940 = vtos %v939
        %v941 = vstv %s940
        %vm942 = vcmask 0
        %943 = vst.msk [vmem:[%s399] sm:$0x1] %vm942, %v941
        %v944 = vmul.f32 %v406, %v406
        %v945 = vmul.f32 %v407, %v407
        %v947 = vcombine.high %v944, %v944
        %v949 = vsel %vm926, %v944, 0.0
        %v950 = vsel %vm926, %v947, 0.0
        %v951 = vadd.f32 %v949, %v950
        %v952 = vsel %vm926, %v945, 0.0
        %v953 = vadd.f32 %v951, %v952
        %954 = vadd.xlane.f32.xlu0 %v953
        %v955 = vpop.xlane.xlu0 %954
        %v956 = vrot.slane %v955, 4
        %v957 = vadd.f32 %v955, %v956
        %v958 = vrot.slane %v957, 2
        %v959 = vadd.f32 %v957, %v958
        %v960 = vrot.slane %v959, 1
        %v961 = vadd.f32 %v959, %v960
        %s962 = vtos %v961
        %v963 = vstv %s962
        %964 = vst.msk [vmem:[%s405] sm:$0x1] %vm942, %v963
        %s965 = sand.u32 %s176, 1
        %s966 = scalar_lea.sflag [#allocation7], %s965
        %s967 = sand.u32 %s176, 1
        %s968 = smul.addr %s967, 12
        %s969 = scalar_lea.vmem [#allocation16], %s968
        %s970 = sand.u32 %s37, 1
        %s971 = scalar_lea.sflag [#allocation18], %s970
        %s972 = sand.u32 %s202, 1
        %s973 = scalar_lea.vmem [#allocation17], %s972
        %s974 = sand.u32 %s37, 1
        %s975 = scalar_lea.sflag [#allocation18], %s974
        %s976 = sand.u32 %s228, 1
        %s977 = scalar_lea.vmem [#allocation19], %s976
        // Predicated region
        $region69: #{tpu_custom_call.1} parent=43 // pred_check
          %p978 = pneg %p186
        $region70: #{tpu_custom_call.1} parent=43 // pred_check_branch
          %980 = sbr.rel (%p978) target = $region72
        $region71: #{tpu_custom_call.1} parent=43 // pred_region
          %s982 = ssub.s32 192, 192
          %983 = vsyncadd %s966, %s982
          %s984 = smul.addr %s37, 3
          %s985 = smul.addr %s984, 64
          %s986 = scalar_lea.hbm %s7, %s985
          %s988 = sshll.u32 %s969, 4
          %s989 = int_to_ptr.vmem [resolvable:$true] %s988
          %991 = dma.vmem_to_hbm [thread:$0]  %s989, 192, %s986, %s966
        $region72: #{tpu_custom_call.1} parent=43 // pred_fallthru
          _
        // Predicated region
        $region73: #{tpu_custom_call.1} parent=43 // pred_check
          %p992 = pneg %p212
        $region74: #{tpu_custom_call.1} parent=43 // pred_check_branch
          %994 = sbr.rel (%p992) target = $region76
        $region75: #{tpu_custom_call.1} parent=43 // pred_region
          %s996 = ssub.s32 16, 16
          %997 = vsyncadd %s971, %s996
          %s998 = smul.addr %s37, 16
          %s999 = scalar_lea.hbm %s8, %s998
          %s1001 = sshll.u32 %s973, 4
          %s1002 = int_to_ptr.vmem [resolvable:$true] %s1001
          %1004 = dma.vmem_to_hbm [thread:$0]  %s1002, 16, %s999, %s971
        $region76: #{tpu_custom_call.1} parent=43 // pred_fallthru
          _
        // Predicated region
        $region77: #{tpu_custom_call.1} parent=43 // pred_check
          %p1005 = pneg %p238
        $region78: #{tpu_custom_call.1} parent=43 // pred_check_branch
          %1007 = sbr.rel (%p1005) target = $region80
        $region79: #{tpu_custom_call.1} parent=43 // pred_region
          %s1009 = ssub.s32 16, 16
          %1010 = vsyncadd %s975, %s1009
          %s1011 = smul.addr %s37, 16
          %s1012 = scalar_lea.hbm %s9, %s1011
          %s1014 = sshll.u32 %s977, 4
          %s1015 = int_to_ptr.vmem [resolvable:$true] %s1014
          %1017 = dma.vmem_to_hbm [thread:$0]  %s1015, 16, %s1012, %s975
        $region80: #{tpu_custom_call.1} parent=43 // pred_fallthru
          _
      $region44: #{tpu_custom_call.1} parent=5 // pred_fallthru
        _
      %p1018 = scmp.le.s32.totalorder 2, %s32
      // Predicated region
      $region81: #{tpu_custom_call.1} parent=5 // pred_check
        %p1019 = pneg %p1018
      $region82: #{tpu_custom_call.1} parent=5 // pred_check_branch
        %1021 = sbr.rel (%p1019) target = $region84
      $region83: #{tpu_custom_call.1} parent=5 // pred_region
        %s1022 = ssub.s32 %s32, 2
        // Predicated region
        $region85: #{tpu_custom_call.1} parent=83 // pred_check
          %p1023 = pneg %p192
        $region86: #{tpu_custom_call.1} parent=83 // pred_check_branch
          %1025 = sbr.rel (%p1023) target = $region88
        $region87: #{tpu_custom_call.1} parent=83 // pred_region
          %s1026 = sand.u32 %s177, 1
          %s1027 = scalar_lea.sflag [#allocation7], %s1026
          %s1028 = sand.u32 %s177, 1
          %s1029 = smul.addr %s1028, 12
          %s1030 = scalar_lea.vmem [#allocation16], %s1029
          %1031 = dma.done %s1027, 192
        $region88: #{tpu_custom_call.1} parent=83 // pred_fallthru
          _
        // Predicated region
        $region89: #{tpu_custom_call.1} parent=83 // pred_check
          %p1032 = pneg %p218
        $region90: #{tpu_custom_call.1} parent=83 // pred_check_branch
          %1034 = sbr.rel (%p1032) target = $region92
        $region91: #{tpu_custom_call.1} parent=83 // pred_region
          %s1035 = sand.u32 %s38, 1
          %s1036 = scalar_lea.sflag [#allocation18], %s1035
          %s1037 = sand.u32 %s203, 1
          %s1038 = scalar_lea.vmem [#allocation17], %s1037
          %1039 = dma.done %s1036, 16
        $region92: #{tpu_custom_call.1} parent=83 // pred_fallthru
          _
        // Predicated region
        $region93: #{tpu_custom_call.1} parent=83 // pred_check
          %p1040 = pneg %p244
        $region94: #{tpu_custom_call.1} parent=83 // pred_check_branch
          %1042 = sbr.rel (%p1040) target = $region96
        $region95: #{tpu_custom_call.1} parent=83 // pred_region
          %s1043 = sand.u32 %s38, 1
          %s1044 = scalar_lea.sflag [#allocation18], %s1043
          %s1045 = sand.u32 %s229, 1
          %s1046 = scalar_lea.vmem [#allocation19], %s1045
          %1047 = dma.done %s1044, 16
        $region96: #{tpu_custom_call.1} parent=83 // pred_fallthru
          _
      $region84: #{tpu_custom_call.1} parent=5 // pred_fallthru
        _
    $region6: #{tpu_custom_call.1} parent=1 // loop_footer
      %s36 = sadd.s32 1, %s32
    $region7: #{tpu_custom_call.1} parent=1 // loop_footer_branch
      %31 = sbr.rel target = $region3
    $region8: #{tpu_custom_call.1} parent=1 // loop_exit
      _
    %1048 = vsyncpa [#allocation6], 1
    %s1049 = scalar_lea.sflag [#allocation6], 1
    %1050 = vsyncpa %s1049, 1
    %1051 = vsyncpa [#allocation9], 1
    %1052 = vsyncpa [#allocation12], 1
    %1053 = vsyncpa [#allocation15], 1
    %1054 = vsyncpa [#allocation7], 1
    %s1055 = scalar_lea.sflag [#allocation7], 1
    %1056 = vsyncpa %s1055, 1
    %1057 = vsyncpa [#allocation18], 1
    %s1058 = scalar_lea.sflag [#allocation18], 1
    %1059 = vsyncpa %s1058, 1

</llo_original>
